<compile_context>
chip_gen: v5e
topology: v5e:2x2
jax: 0.10.0
libtpu: 0.0.40
codegen_flags: <defaults>
</compile_context>

<pallas_src>
import jax
import jax.numpy as jnp
from jax.experimental import pallas as pl
from jax.experimental.pallas import tpu as pltpu

N = 32
HIDDEN = 32

# Packed parameter layout, shape (HIDDEN, HIDDEN + 5):
#   cols [0, H)      : W2  (PyTorch layout (out, in) = (32, 32))
#   col   H          : w1  (Linear(1, H) weight column, length H)
#   col   H + 1      : b1
#   col   H + 2      : b2
#   col   H + 3      : w3  (Linear(H, 1) weight row, stored as a column)
#   [0,   H + 4]     : b3  (scalar)
PACK_COLS = HIDDEN + 5


def mlp_kernel(x_ref, p_ref, o_ref):
    H = HIDDEN
    x = x_ref[...]                                # (1, N)   batch on lanes

    w2 = p_ref[:, 0:H]                            # (H, H)
    w1 = p_ref[:, H:H + 1]                        # (H, 1)
    b1 = p_ref[:, H + 1:H + 2]                    # (H, 1)
    b2 = p_ref[:, H + 2:H + 3]                    # (H, 1)
    w3 = p_ref[:, H + 3:H + 4]                    # (H, 1)
    b3 = p_ref[0:1, H + 4:H + 5]                  # (1, 1)

    # Layer 1: Linear(1, H) == outer product -> pure VPU broadcast multiply.
    h1 = jnp.maximum(w1 * x + b1, 0.0)            # (H, N)

    # Layer 2: Linear(H, H) -> the only real MXU matmul.
    h2 = jnp.dot(w2, h1, preferred_element_type=jnp.float32) + b2
    h2 = jnp.maximum(h2, 0.0)                     # (H, N)

    # Layer 3: Linear(H, 1) == per-column dot -> VPU multiply + sublane reduce.
    out = jnp.sum(w3 * h2, axis=0, keepdims=True) + b3   # (1, N) lane-dense
    o_ref[...] = out.astype(o_ref.dtype)


@jax.jit
def mlp_forward(x, packed_params):
    """x: (N, 1) as in PyTorch; returns (N, 1)."""
    n = x.shape[0]
    x_row = x.reshape(1, n)                       # put batch on the lane axis
    out_row = pl.pallas_call(
        mlp_kernel,
        out_shape=jax.ShapeDtypeStruct((1, n), jnp.float32),
        in_specs=[pl.BlockSpec(memory_space=pltpu.MemorySpace.VMEM),
                  pl.BlockSpec(memory_space=pltpu.MemorySpace.VMEM)],
        out_specs=pl.BlockSpec(memory_space=pltpu.MemorySpace.VMEM),
    )(x_row, packed_params)
    return out_row.reshape(n, 1)


def init_params(key):
    """PyTorch nn.Linear default init, in PyTorch (out, in) layout."""
    ks = jax.random.split(key, 6)

    def linear(kw, kb, fan_in, fan_out):
        bound = 1.0 / jnp.sqrt(jnp.float32(fan_in))
        w = jax.random.uniform(kw, (fan_out, fan_in), jnp.float32, -bound, bound)
        b = jax.random.uniform(kb, (fan_out,), jnp.float32, -bound, bound)
        return w, b

    w1, b1 = linear(ks[0], ks[1], 1, HIDDEN)          # (32, 1), (32,)
    w2, b2 = linear(ks[2], ks[3], HIDDEN, HIDDEN)     # (32, 32), (32,)
    w3, b3 = linear(ks[4], ks[5], HIDDEN, 1)          # (1, 32), (1,)
    return w1, b1, w2, b2, w3, b3


def pack_params(w1, b1, w2, b2, w3, b3):
    """Pack all 6 parameter tensors into one (HIDDEN, HIDDEN+5) f32 slab."""
    H = HIDDEN
    p = jnp.zeros((H, PACK_COLS), jnp.float32)
    p = p.at[:, 0:H].set(w2)
    p = p.at[:, H].set(w1[:, 0])
    p = p.at[:, H + 1].set(b1)
    p = p.at[:, H + 2].set(b2)
    p = p.at[:, H + 3].set(w3[0, :])
    p = p.at[0, H + 4].set(b3[0])
    return p


def reference_forward(x, w1, b1, w2, b2, w3, b3):
    h1 = jnp.maximum(x @ w1.T + b1, 0.0)
    h2 = jnp.maximum(h1 @ w2.T + b2, 0.0)
    return h2 @ w3.T + b3


if __name__ == "__main__":
    key = jax.random.PRNGKey(0)
    kx, kp = jax.random.split(key)

    x = jax.random.normal(kx, (N, 1), jnp.float32)    # matches torch.randn(N, 1)
    params = init_params(kp)
    packed = pack_params(*params)

    out = mlp_forward(x, packed)
    out = jax.block_until_ready(out)

    ref = reference_forward(x, *params)
    assert out.shape == (N, 1)
    assert jnp.allclose(out, ref, atol=1e-5, rtol=1e-5)

    print("KERNEL_OK")
</pallas_src>

<mosaic_0001>
module attributes {stable_mosaic.version = 11 : i64} {
  func.func @mlp_kernel(%arg0: memref<1x32xf32, #tpu.memory_space<vmem>>, %arg1: memref<32x37xf32, #tpu.memory_space<vmem>>, %arg2: memref<1x32xf32, #tpu.memory_space<vmem>>) attributes {dimension_semantics = [], scalar_prefetch = 0 : i64, scratch_operands = 0 : i64, tpu.core_type = #tpu.core_type<tc>} {
    %c0 = arith.constant 0 : index
    %c0_0 = arith.constant 0 : index
    %0 = vector.load %arg0[%c0, %c0_0] : memref<1x32xf32, #tpu.memory_space<vmem>>, vector<1x32xf32>
    %c0_1 = arith.constant 0 : index
    %c0_2 = arith.constant 0 : index
    %1 = vector.load %arg1[%c0_1, %c0_2] : memref<32x37xf32, #tpu.memory_space<vmem>>, vector<32x32xf32>
    %c0_3 = arith.constant 0 : index
    %c32 = arith.constant 32 : index
    %2 = vector.load %arg1[%c0_3, %c32] : memref<32x37xf32, #tpu.memory_space<vmem>>, vector<32x1xf32>
    %c0_4 = arith.constant 0 : index
    %c33 = arith.constant 33 : index
    %3 = vector.load %arg1[%c0_4, %c33] : memref<32x37xf32, #tpu.memory_space<vmem>>, vector<32x1xf32>
    %c0_5 = arith.constant 0 : index
    %c34 = arith.constant 34 : index
    %4 = vector.load %arg1[%c0_5, %c34] : memref<32x37xf32, #tpu.memory_space<vmem>>, vector<32x1xf32>
    %c0_6 = arith.constant 0 : index
    %c35 = arith.constant 35 : index
    %5 = vector.load %arg1[%c0_6, %c35] : memref<32x37xf32, #tpu.memory_space<vmem>>, vector<32x1xf32>
    %c0_7 = arith.constant 0 : index
    %c36 = arith.constant 36 : index
    %6 = vector.load %arg1[%c0_7, %c36] : memref<32x37xf32, #tpu.memory_space<vmem>>, vector<1x1xf32>
    %7 = vector.broadcast %2 : vector<32x1xf32> to vector<32x32xf32>
    %8 = vector.broadcast %0 : vector<1x32xf32> to vector<32x32xf32>
    %9 = arith.mulf %7, %8 : vector<32x32xf32>
    %10 = vector.broadcast %3 : vector<32x1xf32> to vector<32x32xf32>
    %11 = arith.addf %9, %10 : vector<32x32xf32>
    %cst = arith.constant 0.000000e+00 : f32
    %12 = vector.broadcast %cst : f32 to vector<32x32xf32>
    %13 = arith.maximumf %11, %12 : vector<32x32xf32>
    %cst_8 = arith.constant dense<0.000000e+00> : vector<32x32xf32>
    %14 = tpu.matmul %1, %13, %cst_8 {dimension_numbers = #tpu.dot_dimension_numbers<[1], [0], [0], [1], [0, 0, 1, 1], [], []>} : vector<32x32xf32>, vector<32x32xf32>, vector<32x32xf32> -> vector<32x32xf32>
    %15 = vector.broadcast %4 : vector<32x1xf32> to vector<32x32xf32>
    %16 = arith.addf %14, %15 : vector<32x32xf32>
    %cst_9 = arith.constant 0.000000e+00 : f32
    %17 = vector.broadcast %cst_9 : f32 to vector<32x32xf32>
    %18 = arith.maximumf %16, %17 : vector<32x32xf32>
    %19 = vector.broadcast %5 : vector<32x1xf32> to vector<32x32xf32>
    %20 = arith.mulf %19, %18 : vector<32x32xf32>
    %cst_10 = arith.constant dense<0.000000e+00> : vector<32xf32>
    %21 = vector.multi_reduction <add>, %20, %cst_10 [0] : vector<32x32xf32> to vector<32xf32>
    %22 = vector.shape_cast %21 : vector<32xf32> to vector<1x32xf32>
    %23 = vector.broadcast %6 : vector<1x1xf32> to vector<1x32xf32>
    %24 = arith.addf %22, %23 : vector<1x32xf32>
    %c0_11 = arith.constant 0 : index
    %c0_12 = arith.constant 0 : index
    %25 = vector.load %arg2[%c0_11, %c0_12] : memref<1x32xf32, #tpu.memory_space<vmem>>, vector<1x32xf32>
    tpu.vector_store %arg2[%c0_11, %c0_12], %24 {strides = array<i32>} : memref<1x32xf32, #tpu.memory_space<vmem>>, vector<1x32xf32>,
    return
  }
}

</mosaic_0001>

<llo_original>
// kernel: mlp_forward.1
$region0: #{mlp_forward.1}
  #allocation0 [shape = 'u32[]', space=smem, size = 0x4, offset = 0x4, fixed_abs, tag = 'smem constant byte address 0x4 - core index']
  #allocation1 [shape = 'u32[72,128]{1,0:T(1,128)}', space=vmem, size = 0x9000, scoped, tag = 'internal scratch']
  %s0 = inlined_call_operand.hbm [shape: f32[1,32], index: 0, kind: input, shape index: {}]
  %s1 = inlined_call_operand.hbm [shape: f32[32,37], index: 1, kind: input, shape index: {}]
  %s2 = inlined_call_operand.hbm [shape: f32[1,32], index: 2, kind: output, shape index: {}]
  %s3 = sld [smem:[#allocation0]]
  $region26: #{mlp_forward.1} parent=0
    _
  %s5 = ssub.s32 1, %s3
  %s6 = scalar_select 0, %s5, %s3
  $region1: #{mlp_forward.1} parent=0
    #allocation2 [shape = 'u8[512]{0}', space=vmem, size = 0x400, scoped, tag = 'input window, operand 0, single buffered']
    #allocation3 [shape = 's32[1]{0}', space=sflag, size = 0x4, scoped, tag = 'scoped memory for mlp_forward.1']
    #allocation4 [shape = 's32[1]{0}', space=sflag, size = 0x4, scoped, tag = 'scoped memory for mlp_forward.1']
    #allocation5 [shape = 'u8[16384]{0}', space=vmem, size = 0x4000, scoped, tag = 'input window, operand 1, single buffered']
    #allocation6 [shape = 's32[1]{0}', space=sflag, size = 0x4, scoped, tag = 'scoped memory for mlp_forward.1']
    #allocation7 [shape = 'u8[512]{0}', space=vmem, size = 0x400, scoped, tag = 'output window, operand 0, single buffered']
    %7 = vsyncpa [#allocation3], 0
    %8 = vsyncpa [#allocation6], 0
    %9 = vsyncpa [#allocation4], 0
    // Predicated region
    $region2: #{mlp_forward.1} parent=1 // pred_check
      _
    $region3: #{mlp_forward.1} parent=1 // pred_check_branch
      %11 = sbr.rel (0) target = $region5
    $region4: #{mlp_forward.1} parent=1 // pred_region
      %13 = vsyncadd [#allocation3], 0
      %s15 = sshll.u32 %s0, 4
      %s16 = int_to_ptr.hbm [resolvable:$true] %s15
      %s17 = sshll.u32 [#allocation2], 4
      %s18 = int_to_ptr.vmem [resolvable:$true] %s17
      %20 = dma.hbm_to_vmem [thread:$0]  %s16, 16, %s18, [#allocation3]
    $region5: #{mlp_forward.1} parent=1 // pred_fallthru
      _
    // Predicated region
    $region6: #{mlp_forward.1} parent=1 // pred_check
      _
    $region7: #{mlp_forward.1} parent=1 // pred_check_branch
      %22 = sbr.rel (0) target = $region9
    $region8: #{mlp_forward.1} parent=1 // pred_region
      %24 = vsyncadd [#allocation6], 0
      %s25 = sshll.u32 %s1, 4
      %s26 = int_to_ptr.hbm [resolvable:$true] %s25
      %s27 = sshll.u32 [#allocation5], 4
      %s28 = int_to_ptr.vmem [resolvable:$true] %s27
      %33 = dma.hbm_to_vmem [thread:$0]  %s26, 512, %s28, [#allocation6], 128, 128, 8
    $region9: #{mlp_forward.1} parent=1 // pred_fallthru
      _
    // Predicated region
    $region10: #{mlp_forward.1} parent=1 // pred_check
      _
    $region11: #{mlp_forward.1} parent=1 // pred_check_branch
      %35 = sbr.rel (0) target = $region13
    $region12: #{mlp_forward.1} parent=1 // pred_region
      %37 = dma.done [#allocation3], 16
    $region13: #{mlp_forward.1} parent=1 // pred_fallthru
      _
    // Predicated region
    $region14: #{mlp_forward.1} parent=1 // pred_check
      _
    $region15: #{mlp_forward.1} parent=1 // pred_check_branch
      %39 = sbr.rel (0) target = $region17
    $region16: #{mlp_forward.1} parent=1 // pred_region
      %41 = dma.done [#allocation6], 512
    $region17: #{mlp_forward.1} parent=1 // pred_fallthru
      _
    %v42 = vld [vmem:[#allocation2] sm:$0x1]
    %v43 = vld [vmem:[#allocation5] sm:$0xff]
    %v44 = vld [vmem:[#allocation5 + $0x8] sm:$0xff]
    %v45 = vld [vmem:[#allocation5 + $0x10] sm:$0xff]
    %v46 = vld [vmem:[#allocation5 + $0x18] sm:$0xff]
    %v47 = vld [vmem:[#allocation5] sm:$0x1]
    %49 = vset.pattern.permute.xlu0 32
    %50 = vperm.xlu0 %49, %v43
    %v51 = vpop.permute.xlu0 %50
    %54 = vset.pattern.permute.xlu0 32
    %55 = vperm.xlu0 %54, %v44
    %v56 = vpop.permute.xlu0 %55
    %59 = vset.pattern.permute.xlu0 32
    %60 = vperm.xlu0 %59, %v45
    %v61 = vpop.permute.xlu0 %60
    %64 = vset.pattern.permute.xlu0 32
    %65 = vperm.xlu0 %64, %v46
    %v66 = vpop.permute.xlu0 %65
    %v69 = vperm.slane %v42, 0
    %v71 = vmul.f32 %v51, %v69
    %v72 = vmul.f32 %v56, %v69
    %v73 = vmul.f32 %v61, %v69
    %v74 = vmul.f32 %v66, %v69
    %75 = vset.pattern.permute.xlu0 33
    %76 = vperm.xlu0 %75, %v43
    %v77 = vpop.permute.xlu0 %76
    %79 = vset.pattern.permute.xlu0 33
    %80 = vperm.xlu0 %79, %v44
    %v81 = vpop.permute.xlu0 %80
    %83 = vset.pattern.permute.xlu0 33
    %84 = vperm.xlu0 %83, %v45
    %v85 = vpop.permute.xlu0 %84
    %87 = vset.pattern.permute.xlu0 33
    %88 = vperm.xlu0 %87, %v46
    %v89 = vpop.permute.xlu0 %88
    %v91 = vadd.f32 %v71, %v77
    %v92 = vadd.f32 %v72, %v81
    %v93 = vadd.f32 %v73, %v85
    %v94 = vadd.f32 %v74, %v89
    %v95 = vmax.f32 %v91, 0.0
    %v96 = vmax.f32 %v92, 0.0
    %v97 = vmax.f32 %v93, 0.0
    %v98 = vmax.f32 %v94, 0.0
    %99 = vset.pattern.permute.xlu0 34
    %100 = vperm.xlu0 %99, %v43
    %v101 = vpop.permute.xlu0 %100
    %103 = vset.pattern.permute.xlu0 34
    %104 = vperm.xlu0 %103, %v44
    %v105 = vpop.permute.xlu0 %104
    %107 = vset.pattern.permute.xlu0 34
    %108 = vperm.xlu0 %107, %v45
    %v109 = vpop.permute.xlu0 %108
    %111 = vset.pattern.permute.xlu0 34
    %112 = vperm.xlu0 %111, %v46
    %v113 = vpop.permute.xlu0 %112
    %vm115 = vcmask 261120
    %v116 = vsel %vm115, %v43, 0
    %v118 = vsel %vm115, %v44, 0
    %v120 = vsel %vm115, %v45, 0
    %v122 = vsel %vm115, %v46, 0
    %124 = vmatpush.msra.mxu0 0.0
    %125 = vmatpush.msra.mxu0 0.0
    %126 = vmatpush.msra.mxu0 0.0
    %127 = vmatpush.msra.mxu0 0.0
    %128 = vmatpush.msra.mxu0 0.0
    %129 = vmatpush.msra.mxu0 0.0
    %130 = vmatpush.msra.mxu0 0.0
    %131 = vmatpush.msra.mxu0 0.0
    %132 = vmatpush.msra.mxu0 0.0
    %133 = vmatpush.msra.mxu0 0.0
    %134 = vmatpush.msra.mxu0 0.0
    %135 = vmatpush.msra.mxu0 0.0
    %136 = vmatpush.msra.mxu0 %v98
    %137 = vmatpush.msra.mxu0 %v97
    %138 = vmatpush.msra.mxu0 %v96
    %139 = vmatpush.msra.mxu0 %v95
    %140 = vmatmul.f32.gmra.mxu0 %v116
    %v141 = vpop.f32.mrf.mxu0
    %v142 = vadd.f32 %v101, %v141
    %143 = vmatmul.f32.gmra.mxu0 %v118
    %v144 = vpop.f32.mrf.mxu0
    %v145 = vadd.f32 %v105, %v144
    %146 = vmatmul.f32.gmra.mxu0 %v120
    %v147 = vpop.f32.mrf.mxu0
    %v148 = vadd.f32 %v109, %v147
    %149 = vmatmul.f32.gmra.mxu0 %v122
    %v150 = vpop.f32.mrf.mxu0
    %v151 = vadd.f32 %v113, %v150
    %152 = vdwg.mxu0
    %v153 = vmax.f32 %v142, 0.0
    %v154 = vmax.f32 %v145, 0.0
    %v155 = vmax.f32 %v148, 0.0
    %v156 = vmax.f32 %v151, 0.0
    %157 = vset.pattern.permute.xlu0 35
    %158 = vperm.xlu0 %157, %v43
    %v159 = vpop.permute.xlu0 %158
    %161 = vset.pattern.permute.xlu0 35
    %162 = vperm.xlu0 %161, %v44
    %v163 = vpop.permute.xlu0 %162
    %165 = vset.pattern.permute.xlu0 35
    %166 = vperm.xlu0 %165, %v45
    %v167 = vpop.permute.xlu0 %166
    %169 = vset.pattern.permute.xlu0 35
    %170 = vperm.xlu0 %169, %v46
    %v171 = vpop.permute.xlu0 %170
    %v173 = vmul.f32 %v159, %v153
    %v174 = vmul.f32 %v163, %v154
    %v175 = vmul.f32 %v167, %v155
    %v176 = vmul.f32 %v171, %v156
    %v177 = vsel %vm115, %v173, 0.0
    %v178 = vsel %vm115, %v174, 0.0
    %v179 = vadd.f32 %v177, %v178
    %v180 = vsel %vm115, %v175, 0.0
    %v181 = vadd.f32 %v179, %v180
    %v182 = vsel %vm115, %v176, 0.0
    %v183 = vadd.f32 %v181, %v182
    %v184 = vrot.slane %v183, 4
    %v185 = vadd.f32 %v183, %v184
    %v186 = vrot.slane %v185, 2
    %v187 = vadd.f32 %v185, %v186
    %v188 = vrot.slane %v187, 1
    %v189 = vadd.f32 %v187, %v188
    %191 = vset.pattern.permute.xlu0 36
    %192 = vperm.xlu0 %191, %v47
    %v193 = vpop.permute.xlu0 %192
    %v195 = vadd.f32 %v189, %v193
    %vm196 = vcmask 253952
    %197 = vst.msk [vmem:[#allocation7] sm:$0x1] %vm196, %v195
    // Predicated region
    $region18: #{mlp_forward.1} parent=1 // pred_check
      _
    $region19: #{mlp_forward.1} parent=1 // pred_check_branch
      %199 = sbr.rel (0) target = $region21
    $region20: #{mlp_forward.1} parent=1 // pred_region
      %201 = vsyncadd [#allocation4], 0
      %s203 = sshll.u32 [#allocation7], 4
      %s204 = int_to_ptr.vmem [resolvable:$true] %s203
      %s205 = sshll.u32 %s2, 4
      %s206 = int_to_ptr.hbm [resolvable:$true] %s205
      %208 = dma.vmem_to_hbm [thread:$0]  %s204, 16, %s206, [#allocation4]
    $region21: #{mlp_forward.1} parent=1 // pred_fallthru
      _
    // Predicated region
    $region22: #{mlp_forward.1} parent=1 // pred_check
      _
    $region23: #{mlp_forward.1} parent=1 // pred_check_branch
      %210 = sbr.rel (0) target = $region25
    $region24: #{mlp_forward.1} parent=1 // pred_region
      %212 = dma.done [#allocation4], 16
    $region25: #{mlp_forward.1} parent=1 // pred_fallthru
      _
    %213 = vsyncpa [#allocation3], 1
    %214 = vsyncpa [#allocation6], 1
    %215 = vsyncpa [#allocation4], 1

</llo_original>
